<compile_context>
chip_gen: v5e
topology: v5e:2x2
jax: 0.10.0
libtpu: 0.0.40
codegen_flags: <defaults>
</compile_context>

<pallas_src>
import math

import jax
import jax.numpy as jnp
import numpy as np
from jax.experimental import pallas as pl

# ---------------- problem sizes (small, consistent with the module) ----------
B = 2          # batch
S_TGT = 8      # target sequence length
S_SRC = 8      # source (encoder) sequence length
D_MODEL = 32
N_HEADS = 4
D_K = D_MODEL // N_HEADS
D_FF = 64
LN_EPS = 1e-6
LN_ALPHA = 1.0     # nn.Parameter(torch.ones(1))
LN_BIAS = 0.0      # nn.Parameter(torch.zeros(1))
MASK_VALUE = -1e9  # float32 path of masked_fill
LANE = 128         # lane-alignment unit for the packed parameter slabs

# 128-aligned segment indices inside the packed slabs
#   weight slab (fan-in D): wq1 wk1 wv1 wo1 wq2 wk2 wv2 wo2 w1   -> (D, 9*128)
#   bias slab:              bq1 bk1 bv1 bo1 bq2 bk2 bv2 bo2 b1 b2 -> (1, 10*128)


# ---------------- kernel ------------------------------------------------------
def decoder_layer_kernel(x_ref, enc_ref, tb_ref, sb_ref, hs_t_ref, hs_s_ref,
                         wd_ref, w2_ref, b_ref, out_ref):
  D, F, H = D_MODEL, D_FF, N_HEADS

  x = x_ref[...]        # (Rq, D)  - batch folded onto rows
  enc = enc_ref[...]    # (Rk, D)

  def wseg(i, w):       # 128-lane-aligned weight segment (no lane rotate)
    return wd_ref[:, i * LANE:i * LANE + w]

  def bseg(i, w):       # 128-lane-aligned bias segment
    return b_ref[:, i * LANE:i * LANE + w]

  def layer_norm(v):
    # torch: mean/std over last dim, std is UNBIASED (N-1), eps added to std.
    mean = jnp.mean(v, axis=-1, keepdims=True)
    var = jnp.sum((v - mean) ** 2, axis=-1, keepdims=True) * (
        1.0 / (v.shape[-1] - 1))
    inv = pl.reciprocal(jnp.sqrt(var) + LN_EPS, approx=False)
    return LN_ALPHA * ((v - mean) * inv) + LN_BIAS

  inv_sqrt_dk = 1.0 / math.sqrt(D_K)

  def attend(q, k, v, bias, head_sel, wo, bo):
    # Lane-batched multi-head attention, no per-head loop.
    #   head_sel: (H*Rk, D), head_sel[h*Rk+j, d] = 1 iff d belongs to head h.
    #   k_st/v_st rows h*Rk..(h+1)*Rk hold K/V restricted to head h's lanes.
    k_st = jnp.concatenate([k] * H, axis=0) * head_sel      # (H*Rk, D)
    v_st = jnp.concatenate([v] * H, axis=0) * head_sel      # (H*Rk, D)

    # All heads' scores in ONE MXU dot ('qd,rd->qr'): no K^T materialized.
    scores = jax.lax.dot_general(
        q, k_st, (((1,), (1,)), ((), ())),
        preferred_element_type=jnp.float32) * inv_sqrt_dk + bias   # (Rq, H*Rk)

    # Softmax with a global row max (mathematically identical to per-head max;
    # masked columns got -1e9 bias so exp underflows to exactly 0).
    m = jnp.max(scores, axis=-1, keepdims=True)
    e = jnp.exp(scores - m)

    # Deferred normalization: unnormalized P@V (which also "concatenates" the
    # heads on the lane axis) and the per-head denominators come from two
    # independent dots; the exact EUP reciprocal overlaps with them.
    unnorm = jnp.dot(e, v_st, preferred_element_type=jnp.float32)      # (Rq, D)
    denom = jnp.dot(e, head_sel, preferred_element_type=jnp.float32)   # (Rq, D)
    heads = unnorm * pl.reciprocal(denom, approx=False)

    # concat(heads) @ Wo is a single full (D, D) dot.
    return jnp.dot(heads, wo, preferred_element_type=jnp.float32) + bo

  # ---- residual 1: pre-norm self-attention ----
  xn = layer_norm(x)
  q1 = jnp.dot(xn, wseg(0, D), preferred_element_type=jnp.float32) + bseg(0, D)
  k1 = jnp.dot(xn, wseg(1, D), preferred_element_type=jnp.float32) + bseg(1, D)
  v1 = jnp.dot(xn, wseg(2, D), preferred_element_type=jnp.float32) + bseg(2, D)
  x1 = x + attend(q1, k1, v1, tb_ref[...], hs_t_ref[...],
                  wseg(3, D), bseg(3, D))

  # ---- residual 2: pre-norm cross-attention (K/V from raw encoder output) ----
  x1n = layer_norm(x1)
  q2 = jnp.dot(x1n, wseg(4, D), preferred_element_type=jnp.float32) + bseg(4, D)
  k2 = jnp.dot(enc, wseg(5, D), preferred_element_type=jnp.float32) + bseg(5, D)
  v2 = jnp.dot(enc, wseg(6, D), preferred_element_type=jnp.float32) + bseg(6, D)
  x2 = x1 + attend(q2, k2, v2, sb_ref[...], hs_s_ref[...],
                   wseg(7, D), bseg(7, D))

  # ---- residual 3: pre-norm feed-forward ----
  x2n = layer_norm(x2)
  hdn = jnp.maximum(
      jnp.dot(x2n, wseg(8, F), preferred_element_type=jnp.float32) + bseg(8, F),
      0.0)
  y = x2 + jnp.dot(hdn, w2_ref[...],
                   preferred_element_type=jnp.float32) + bseg(9, D)

  # Direct store: total output is 16x32 f32 = 2 KiB; no repack needed.
  out_ref[...] = y


# ---------------- static prep (runs OUTSIDE the jitted wrapper) ---------------
def build_attn_bias(mask):
  """(B, Sq, Sk) 0/1 mask -> (B*Sq, H*B*Sk) additive bias.

  Block-diagonal over the folded batch (cross-batch entries get -1e9) and
  pre-tiled over the H lane groups.  Note: exact only when every query row has
  at least one unmasked in-batch key (true for causal / all-ones masks here).
  """
  m = np.asarray(mask)
  Bn, Sq, Sk = m.shape
  bd = np.full((Bn * Sq, Bn * Sk), MASK_VALUE, np.float32)
  for b in range(Bn):
    bd[b * Sq:(b + 1) * Sq, b * Sk:(b + 1) * Sk] = np.where(
        m[b] == 0.0, np.float32(MASK_VALUE), np.float32(0.0))
  return jnp.asarray(np.tile(bd, (1, N_HEADS)))


def build_head_sel(n_kv_rows):
  """(H*Rk, D) head-selection matrix: 1 iff lane's head == row group."""
  hs = np.zeros((N_HEADS * n_kv_rows, D_MODEL), np.float32)
  for h in range(N_HEADS):
    hs[h * n_kv_rows:(h + 1) * n_kv_rows, h * D_K:(h + 1) * D_K] = 1.0
  return jnp.asarray(hs)


def pack_params(params):
  """Pack the 20 tiny parameter arrays into 3 slabs, 128-lane aligned."""
  (wq1, bq1, wk1, bk1, wv1, bv1, wo1, bo1,
   wq2, bq2, wk2, bk2, wv2, bv2, wo2, bo2,
   w1, b1, w2, b2) = params

  def pad(a):
    return jnp.pad(a, ((0, 0), (0, LANE - a.shape[1])))

  w_slab = jnp.concatenate(
      [pad(w) for w in (wq1, wk1, wv1, wo1, wq2, wk2, wv2, wo2, w1)], axis=1)
  b_slab = jnp.concatenate(
      [pad(b) for b in (bq1, bk1, bv1, bo1, bq2, bk2, bv2, bo2, b1, b2)],
      axis=1)
  return w_slab, w2, b_slab


# ---------------- wrapper -----------------------------------------------------
@jax.jit
def decoder_layer(x, enc, tgt_bias, src_bias, hs_tgt, hs_src,
                  w_slab, w2, b_slab):
  Bn, S, D = x.shape
  Se = enc.shape[1]
  # Fold batch onto rows: one kernel invocation, no grid, no per-step overhead.
  y = pl.pallas_call(
      decoder_layer_kernel,
      out_shape=jax.ShapeDtypeStruct((Bn * S, D), jnp.float32),
  )(x.reshape(Bn * S, D), enc.reshape(Bn * Se, D),
    tgt_bias, src_bias, hs_tgt, hs_src, w_slab, w2, b_slab)
  return y.reshape(Bn, S, D)


# ---------------- pure-JAX reference (torch semantics) ------------------------
def ref_decoder_layer(x, enc, tgt_mask, src_mask, params):
  (wq1, bq1, wk1, bk1, wv1, bv1, wo1, bo1,
   wq2, bq2, wk2, bk2, wv2, bv2, wo2, bo2,
   w1, b1, w2, b2) = params

  def ln(v):
    mean = v.mean(-1, keepdims=True)
    std = jnp.sqrt(((v - mean) ** 2).sum(-1, keepdims=True) / (v.shape[-1] - 1))
    return LN_ALPHA * (v - mean) / (std + LN_EPS) + LN_BIAS

  def mha(q_in, kv_in, mask, wq, bq, wk, bk, wv, bv, wo, bo):
    Bn, Sq, D = q_in.shape
    Skv = kv_in.shape[1]
    q = (q_in @ wq + bq).reshape(Bn, Sq, N_HEADS, D_K).transpose(0, 2, 1, 3)
    k = (kv_in @ wk + bk).reshape(Bn, Skv, N_HEADS, D_K).transpose(0, 2, 1, 3)
    v = (kv_in @ wv + bv).reshape(Bn, Skv, N_HEADS, D_K).transpose(0, 2, 1, 3)
    sc = (q @ k.transpose(0, 1, 3, 2)) / math.sqrt(D_K)
    sc = jnp.where(mask[:, None, :, :] == 0.0, MASK_VALUE, sc)
    w = jax.nn.softmax(sc, axis=-1)
    o = (w @ v).transpose(0, 2, 1, 3).reshape(Bn, Sq, D)
    return o @ wo + bo

  def ffn(v):
    return jnp.maximum(v @ w1 + b1, 0.0) @ w2 + b2

  x1 = x + mha(ln(x), ln(x), tgt_mask, wq1, bq1, wk1, bk1, wv1, bv1, wo1, bo1)
  x2 = x1 + mha(ln(x1), enc, src_mask, wq2, bq2, wk2, bk2, wv2, bv2, wo2, bo2)
  return x2 + ffn(ln(x2))


# ---------------- main --------------------------------------------------------
if __name__ == "__main__":
  key = jax.random.PRNGKey(0)
  keys = jax.random.split(key, 32)
  ki = iter(keys)

  def linear_params(fan_in, fan_out):
    bound = 1.0 / math.sqrt(fan_in)
    w = jax.random.uniform(next(ki), (fan_in, fan_out), jnp.float32,
                           -bound, bound)          # stored as [in, out]
    b = jax.random.uniform(next(ki), (1, fan_out), jnp.float32, -bound, bound)
    return w, b

  # self-attn q/k/v/out, cross-attn q/k/v/out (all D->D), ffn D->F->D
  params = []
  for _ in range(8):                      # 2 attention blocks x 4 linears
    params.extend(linear_params(D_MODEL, D_MODEL))
  params.extend(linear_params(D_MODEL, D_FF))   # ffn.linear1
  params.extend(linear_params(D_FF, D_MODEL))   # ffn.linear2
  params = tuple(params)

  x = jax.random.normal(next(ki), (B, S_TGT, D_MODEL), jnp.float32)
  enc_out = jax.random.normal(next(ki), (B, S_SRC, D_MODEL), jnp.float32)

  # tgt mask: causal; src mask: all ones (per-batch, 0/1 floats).
  causal = jnp.tril(jnp.ones((S_TGT, S_TGT), jnp.float32))
  tgt_mask = jnp.broadcast_to(causal, (B, S_TGT, S_TGT))
  src_mask = jnp.ones((B, S_TGT, S_SRC), jnp.float32)

  # Static prep done once, outside the jitted wrapper.
  tgt_bias = build_attn_bias(tgt_mask)            # (B*S_TGT, H*B*S_TGT)
  src_bias = build_attn_bias(src_mask)            # (B*S_TGT, H*B*S_SRC)
  hs_tgt = build_head_sel(B * S_TGT)              # (H*B*S_TGT, D)
  hs_src = build_head_sel(B * S_SRC)              # (H*B*S_SRC, D)
  w_slab, w2_mat, b_slab = pack_params(params)

  out = decoder_layer(x, enc_out, tgt_bias, src_bias, hs_tgt, hs_src,
                      w_slab, w2_mat, b_slab)
  out = jax.block_until_ready(out)

  ref = ref_decoder_layer(x, enc_out, tgt_mask, src_mask, params)
  np.testing.assert_allclose(np.asarray(out), np.asarray(ref),
                             rtol=1e-4, atol=1e-4)
  print("KERNEL_OK")
</pallas_src>

<mosaic_0001>
module attributes {stable_mosaic.version = 11 : i64} {
  func.func @decoder_layer_kernel(%arg0: memref<16x32xf32, #tpu.memory_space<vmem>>, %arg1: memref<16x32xf32, #tpu.memory_space<vmem>>, %arg2: memref<16x64xf32, #tpu.memory_space<vmem>>, %arg3: memref<16x64xf32, #tpu.memory_space<vmem>>, %arg4: memref<64x32xf32, #tpu.memory_space<vmem>>, %arg5: memref<64x32xf32, #tpu.memory_space<vmem>>, %arg6: memref<32x1152xf32, #tpu.memory_space<vmem>>, %arg7: memref<64x32xf32, #tpu.memory_space<vmem>>, %arg8: memref<1x1280xf32, #tpu.memory_space<vmem>>, %arg9: memref<16x32xf32, #tpu.memory_space<vmem>>) attributes {dimension_semantics = [], scalar_prefetch = 0 : i64, scratch_operands = 0 : i64, tpu.core_type = #tpu.core_type<tc>} {
    %c0 = arith.constant 0 : index
    %c0_0 = arith.constant 0 : index
    %0 = vector.load %arg0[%c0, %c0_0] : memref<16x32xf32, #tpu.memory_space<vmem>>, vector<16x32xf32>
    %c0_1 = arith.constant 0 : index
    %c0_2 = arith.constant 0 : index
    %1 = vector.load %arg1[%c0_1, %c0_2] : memref<16x32xf32, #tpu.memory_space<vmem>>, vector<16x32xf32>
    %cst = arith.constant dense<0.000000e+00> : vector<16xf32>
    %2 = vector.multi_reduction <add>, %0, %cst [1] : vector<16x32xf32> to vector<16xf32>
    %3 = vector.shape_cast %2 : vector<16xf32> to vector<16x1xf32>
    %cst_3 = arith.constant 3.200000e+01 : f32
    %4 = vector.broadcast %cst_3 : f32 to vector<16x1xf32>
    %5 = arith.divf %3, %4 : vector<16x1xf32>
    %6 = vector.broadcast %5 : vector<16x1xf32> to vector<16x32xf32>
    %7 = arith.subf %0, %6 : vector<16x32xf32>
    %8 = arith.mulf %7, %7 : vector<16x32xf32>
    %cst_4 = arith.constant dense<0.000000e+00> : vector<16xf32>
    %9 = vector.multi_reduction <add>, %8, %cst_4 [1] : vector<16x32xf32> to vector<16xf32>
    %10 = vector.shape_cast %9 : vector<16xf32> to vector<16x1xf32>
    %cst_5 = arith.constant 0.0322580636 : f32
    %11 = vector.broadcast %cst_5 : f32 to vector<16x1xf32>
    %12 = arith.mulf %10, %11 : vector<16x1xf32>
    %13 = math.sqrt %12 : vector<16x1xf32>
    %cst_6 = arith.constant 9.99999997E-7 : f32
    %14 = vector.broadcast %cst_6 : f32 to vector<16x1xf32>
    %15 = arith.addf %13, %14 : vector<16x1xf32>
    %16 = tpu.reciprocal %15 : vector<16x1xf32> -> vector<16x1xf32>
    %17 = vector.broadcast %5 : vector<16x1xf32> to vector<16x32xf32>
    %18 = arith.subf %0, %17 : vector<16x32xf32>
    %19 = vector.broadcast %16 : vector<16x1xf32> to vector<16x32xf32>
    %20 = arith.mulf %18, %19 : vector<16x32xf32>
    %cst_7 = arith.constant 1.000000e+00 : f32
    %21 = vector.broadcast %cst_7 : f32 to vector<16x32xf32>
    %22 = arith.mulf %21, %20 : vector<16x32xf32>
    %cst_8 = arith.constant 0.000000e+00 : f32
    %23 = vector.broadcast %cst_8 : f32 to vector<16x32xf32>
    %24 = arith.addf %22, %23 : vector<16x32xf32>
    %c0_9 = arith.constant 0 : index
    %c0_10 = arith.constant 0 : index
    %25 = vector.load %arg6[%c0_9, %c0_10] : memref<32x1152xf32, #tpu.memory_space<vmem>>, vector<32x32xf32>
    %cst_11 = arith.constant dense<0.000000e+00> : vector<16x32xf32>
    %26 = tpu.matmul %24, %25, %cst_11 {dimension_numbers = #tpu.dot_dimension_numbers<[1], [0], [0], [1], [0, 0, 1, 1], [], []>} : vector<16x32xf32>, vector<32x32xf32>, vector<16x32xf32> -> vector<16x32xf32>
    %c0_12 = arith.constant 0 : index
    %c0_13 = arith.constant 0 : index
    %27 = vector.load %arg8[%c0_12, %c0_13] : memref<1x1280xf32, #tpu.memory_space<vmem>>, vector<1x32xf32>
    %28 = vector.broadcast %27 : vector<1x32xf32> to vector<16x32xf32>
    %29 = arith.addf %26, %28 : vector<16x32xf32>
    %c0_14 = arith.constant 0 : index
    %c128 = arith.constant 128 : index
    %30 = vector.load %arg6[%c0_14, %c128] : memref<32x1152xf32, #tpu.memory_space<vmem>>, vector<32x32xf32>
    %cst_15 = arith.constant dense<0.000000e+00> : vector<16x32xf32>
    %31 = tpu.matmul %24, %30, %cst_15 {dimension_numbers = #tpu.dot_dimension_numbers<[1], [0], [0], [1], [0, 0, 1, 1], [], []>} : vector<16x32xf32>, vector<32x32xf32>, vector<16x32xf32> -> vector<16x32xf32>
    %c0_16 = arith.constant 0 : index
    %c128_17 = arith.constant 128 : index
    %32 = vector.load %arg8[%c0_16, %c128_17] : memref<1x1280xf32, #tpu.memory_space<vmem>>, vector<1x32xf32>
    %33 = vector.broadcast %32 : vector<1x32xf32> to vector<16x32xf32>
    %34 = arith.addf %31, %33 : vector<16x32xf32>
    %c0_18 = arith.constant 0 : index
    %c256 = arith.constant 256 : index
    %35 = vector.load %arg6[%c0_18, %c256] : memref<32x1152xf32, #tpu.memory_space<vmem>>, vector<32x32xf32>
    %cst_19 = arith.constant dense<0.000000e+00> : vector<16x32xf32>
    %36 = tpu.matmul %24, %35, %cst_19 {dimension_numbers = #tpu.dot_dimension_numbers<[1], [0], [0], [1], [0, 0, 1, 1], [], []>} : vector<16x32xf32>, vector<32x32xf32>, vector<16x32xf32> -> vector<16x32xf32>
    %c0_20 = arith.constant 0 : index
    %c256_21 = arith.constant 256 : index
    %37 = vector.load %arg8[%c0_20, %c256_21] : memref<1x1280xf32, #tpu.memory_space<vmem>>, vector<1x32xf32>
    %38 = vector.broadcast %37 : vector<1x32xf32> to vector<16x32xf32>
    %39 = arith.addf %36, %38 : vector<16x32xf32>
    %c0_22 = arith.constant 0 : index
    %c0_23 = arith.constant 0 : index
    %40 = vector.load %arg2[%c0_22, %c0_23] : memref<16x64xf32, #tpu.memory_space<vmem>>, vector<16x64xf32>
    %c0_24 = arith.constant 0 : index
    %c0_25 = arith.constant 0 : index
    %41 = vector.load %arg4[%c0_24, %c0_25] : memref<64x32xf32, #tpu.memory_space<vmem>>, vector<64x32xf32>
    %c0_26 = arith.constant 0 : index
    %c384 = arith.constant 384 : index
    %42 = vector.load %arg6[%c0_26, %c384] : memref<32x1152xf32, #tpu.memory_space<vmem>>, vector<32x32xf32>
    %c0_27 = arith.constant 0 : index
    %c384_28 = arith.constant 384 : index
    %43 = vector.load %arg8[%c0_27, %c384_28] : memref<1x1280xf32, #tpu.memory_space<vmem>>, vector<1x32xf32>
    %44 = tpu.concatenate %34, %34, %34, %34 in 0 : vector<16x32xf32>, vector<16x32xf32>, vector<16x32xf32>, vector<16x32xf32> -> vector<64x32xf32>
    %45 = arith.mulf %44, %41 : vector<64x32xf32>
    %46 = tpu.concatenate %39, %39, %39, %39 in 0 : vector<16x32xf32>, vector<16x32xf32>, vector<16x32xf32>, vector<16x32xf32> -> vector<64x32xf32>
    %47 = arith.mulf %46, %41 : vector<64x32xf32>
    %cst_29 = arith.constant dense<0.000000e+00> : vector<16x64xf32>
    %48 = tpu.matmul %29, %45, %cst_29 {dimension_numbers = #tpu.dot_dimension_numbers<[1], [1], [0], [0], [0, 0, 1, 0], [], []>} : vector<16x32xf32>, vector<64x32xf32>, vector<16x64xf32> -> vector<16x64xf32>
    %cst_30 = arith.constant 0.353553385 : f32
    %49 = vector.broadcast %cst_30 : f32 to vector<16x64xf32>
    %50 = arith.mulf %48, %49 : vector<16x64xf32>
    %51 = arith.addf %50, %40 : vector<16x64xf32>
    %cst_31 = arith.constant dense<0xFF800000> : vector<16xf32>
    %52 = vector.multi_reduction <maximumf>, %51, %cst_31 [1] : vector<16x64xf32> to vector<16xf32>
    %53 = vector.shape_cast %52 : vector<16xf32> to vector<16x1xf32>
    %54 = vector.broadcast %53 : vector<16x1xf32> to vector<16x64xf32>
    %55 = arith.subf %51, %54 : vector<16x64xf32>
    %56 = math.exp %55 : vector<16x64xf32>
    %cst_32 = arith.constant dense<0.000000e+00> : vector<16x32xf32>
    %57 = tpu.matmul %56, %47, %cst_32 {dimension_numbers = #tpu.dot_dimension_numbers<[1], [0], [0], [1], [0, 0, 1, 1], [], []>} : vector<16x64xf32>, vector<64x32xf32>, vector<16x32xf32> -> vector<16x32xf32>
    %cst_33 = arith.constant dense<0.000000e+00> : vector<16x32xf32>
    %58 = tpu.matmul %56, %41, %cst_33 {dimension_numbers = #tpu.dot_dimension_numbers<[1], [0], [0], [1], [0, 0, 1, 1], [], []>} : vector<16x64xf32>, vector<64x32xf32>, vector<16x32xf32> -> vector<16x32xf32>
    %59 = tpu.reciprocal %58 : vector<16x32xf32> -> vector<16x32xf32>
    %60 = arith.mulf %57, %59 : vector<16x32xf32>
    %cst_34 = arith.constant dense<0.000000e+00> : vector<16x32xf32>
    %61 = tpu.matmul %60, %42, %cst_34 {dimension_numbers = #tpu.dot_dimension_numbers<[1], [0], [0], [1], [0, 0, 1, 1], [], []>} : vector<16x32xf32>, vector<32x32xf32>, vector<16x32xf32> -> vector<16x32xf32>
    %62 = vector.broadcast %43 : vector<1x32xf32> to vector<16x32xf32>
    %63 = arith.addf %61, %62 : vector<16x32xf32>
    %64 = arith.addf %0, %63 : vector<16x32xf32>
    %cst_35 = arith.constant dense<0.000000e+00> : vector<16xf32>
    %65 = vector.multi_reduction <add>, %64, %cst_35 [1] : vector<16x32xf32> to vector<16xf32>
    %66 = vector.shape_cast %65 : vector<16xf32> to vector<16x1xf32>
    %cst_36 = arith.constant 3.200000e+01 : f32
    %67 = vector.broadcast %cst_36 : f32 to vector<16x1xf32>
    %68 = arith.divf %66, %67 : vector<16x1xf32>
    %69 = vector.broadcast %68 : vector<16x1xf32> to vector<16x32xf32>
    %70 = arith.subf %64, %69 : vector<16x32xf32>
    %71 = arith.mulf %70, %70 : vector<16x32xf32>
    %cst_37 = arith.constant dense<0.000000e+00> : vector<16xf32>
    %72 = vector.multi_reduction <add>, %71, %cst_37 [1] : vector<16x32xf32> to vector<16xf32>
    %73 = vector.shape_cast %72 : vector<16xf32> to vector<16x1xf32>
    %cst_38 = arith.constant 0.0322580636 : f32
    %74 = vector.broadcast %cst_38 : f32 to vector<16x1xf32>
    %75 = arith.mulf %73, %74 : vector<16x1xf32>
    %76 = math.sqrt %75 : vector<16x1xf32>
    %cst_39 = arith.constant 9.99999997E-7 : f32
    %77 = vector.broadcast %cst_39 : f32 to vector<16x1xf32>
    %78 = arith.addf %76, %77 : vector<16x1xf32>
    %79 = tpu.reciprocal %78 : vector<16x1xf32> -> vector<16x1xf32>
    %80 = vector.broadcast %68 : vector<16x1xf32> to vector<16x32xf32>
    %81 = arith.subf %64, %80 : vector<16x32xf32>
    %82 = vector.broadcast %79 : vector<16x1xf32> to vector<16x32xf32>
    %83 = arith.mulf %81, %82 : vector<16x32xf32>
    %cst_40 = arith.constant 1.000000e+00 : f32
    %84 = vector.broadcast %cst_40 : f32 to vector<16x32xf32>
    %85 = arith.mulf %84, %83 : vector<16x32xf32>
    %cst_41 = arith.constant 0.000000e+00 : f32
    %86 = vector.broadcast %cst_41 : f32 to vector<16x32xf32>
    %87 = arith.addf %85, %86 : vector<16x32xf32>
    %c0_42 = arith.constant 0 : index
    %c512 = arith.constant 512 : index
    %88 = vector.load %arg6[%c0_42, %c512] : memref<32x1152xf32, #tpu.memory_space<vmem>>, vector<32x32xf32>
    %cst_43 = arith.constant dense<0.000000e+00> : vector<16x32xf32>
    %89 = tpu.matmul %87, %88, %cst_43 {dimension_numbers = #tpu.dot_dimension_numbers<[1], [0], [0], [1], [0, 0, 1, 1], [], []>} : vector<16x32xf32>, vector<32x32xf32>, vector<16x32xf32> -> vector<16x32xf32>
    %c0_44 = arith.constant 0 : index
    %c512_45 = arith.constant 512 : index
    %90 = vector.load %arg8[%c0_44, %c512_45] : memref<1x1280xf32, #tpu.memory_space<vmem>>, vector<1x32xf32>
    %91 = vector.broadcast %90 : vector<1x32xf32> to vector<16x32xf32>
    %92 = arith.addf %89, %91 : vector<16x32xf32>
    %c0_46 = arith.constant 0 : index
    %c640 = arith.constant 640 : index
    %93 = vector.load %arg6[%c0_46, %c640] : memref<32x1152xf32, #tpu.memory_space<vmem>>, vector<32x32xf32>
    %cst_47 = arith.constant dense<0.000000e+00> : vector<16x32xf32>
    %94 = tpu.matmul %1, %93, %cst_47 {dimension_numbers = #tpu.dot_dimension_numbers<[1], [0], [0], [1], [0, 0, 1, 1], [], []>} : vector<16x32xf32>, vector<32x32xf32>, vector<16x32xf32> -> vector<16x32xf32>
    %c0_48 = arith.constant 0 : index
    %c640_49 = arith.constant 640 : index
    %95 = vector.load %arg8[%c0_48, %c640_49] : memref<1x1280xf32, #tpu.memory_space<vmem>>, vector<1x32xf32>
    %96 = vector.broadcast %95 : vector<1x32xf32> to vector<16x32xf32>
    %97 = arith.addf %94, %96 : vector<16x32xf32>
    %c0_50 = arith.constant 0 : index
    %c768 = arith.constant 768 : index
    %98 = vector.load %arg6[%c0_50, %c768] : memref<32x1152xf32, #tpu.memory_space<vmem>>, vector<32x32xf32>
    %cst_51 = arith.constant dense<0.000000e+00> : vector<16x32xf32>
    %99 = tpu.matmul %1, %98, %cst_51 {dimension_numbers = #tpu.dot_dimension_numbers<[1], [0], [0], [1], [0, 0, 1, 1], [], []>} : vector<16x32xf32>, vector<32x32xf32>, vector<16x32xf32> -> vector<16x32xf32>
    %c0_52 = arith.constant 0 : index
    %c768_53 = arith.constant 768 : index
    %100 = vector.load %arg8[%c0_52, %c768_53] : memref<1x1280xf32, #tpu.memory_space<vmem>>, vector<1x32xf32>
    %101 = vector.broadcast %100 : vector<1x32xf32> to vector<16x32xf32>
    %102 = arith.addf %99, %101 : vector<16x32xf32>
    %c0_54 = arith.constant 0 : index
    %c0_55 = arith.constant 0 : index
    %103 = vector.load %arg3[%c0_54, %c0_55] : memref<16x64xf32, #tpu.memory_space<vmem>>, vector<16x64xf32>
    %c0_56 = arith.constant 0 : index
    %c0_57 = arith.constant 0 : index
    %104 = vector.load %arg5[%c0_56, %c0_57] : memref<64x32xf32, #tpu.memory_space<vmem>>, vector<64x32xf32>
    %c0_58 = arith.constant 0 : index
    %c896 = arith.constant 896 : index
    %105 = vector.load %arg6[%c0_58, %c896] : memref<32x1152xf32, #tpu.memory_space<vmem>>, vector<32x32xf32>
    %c0_59 = arith.constant 0 : index
    %c896_60 = arith.constant 896 : index
    %106 = vector.load %arg8[%c0_59, %c896_60] : memref<1x1280xf32, #tpu.memory_space<vmem>>, vector<1x32xf32>
    %107 = tpu.concatenate %97, %97, %97, %97 in 0 : vector<16x32xf32>, vector<16x32xf32>, vector<16x32xf32>, vector<16x32xf32> -> vector<64x32xf32>
    %108 = arith.mulf %107, %104 : vector<64x32xf32>
    %109 = tpu.concatenate %102, %102, %102, %102 in 0 : vector<16x32xf32>, vector<16x32xf32>, vector<16x32xf32>, vector<16x32xf32> -> vector<64x32xf32>
    %110 = arith.mulf %109, %104 : vector<64x32xf32>
    %cst_61 = arith.constant dense<0.000000e+00> : vector<16x64xf32>
    %111 = tpu.matmul %92, %108, %cst_61 {dimension_numbers = #tpu.dot_dimension_numbers<[1], [1], [0], [0], [0, 0, 1, 0], [], []>} : vector<16x32xf32>, vector<64x32xf32>, vector<16x64xf32> -> vector<16x64xf32>
    %cst_62 = arith.constant 0.353553385 : f32
    %112 = vector.broadcast %cst_62 : f32 to vector<16x64xf32>
    %113 = arith.mulf %111, %112 : vector<16x64xf32>
    %114 = arith.addf %113, %103 : vector<16x64xf32>
    %cst_63 = arith.constant dense<0xFF800000> : vector<16xf32>
    %115 = vector.multi_reduction <maximumf>, %114, %cst_63 [1] : vector<16x64xf32> to vector<16xf32>
    %116 = vector.shape_cast %115 : vector<16xf32> to vector<16x1xf32>
    %117 = vector.broadcast %116 : vector<16x1xf32> to vector<16x64xf32>
    %118 = arith.subf %114, %117 : vector<16x64xf32>
    %119 = math.exp %118 : vector<16x64xf32>
    %cst_64 = arith.constant dense<0.000000e+00> : vector<16x32xf32>
    %120 = tpu.matmul %119, %110, %cst_64 {dimension_numbers = #tpu.dot_dimension_numbers<[1], [0], [0], [1], [0, 0, 1, 1], [], []>} : vector<16x64xf32>, vector<64x32xf32>, vector<16x32xf32> -> vector<16x32xf32>
    %cst_65 = arith.constant dense<0.000000e+00> : vector<16x32xf32>
    %121 = tpu.matmul %119, %104, %cst_65 {dimension_numbers = #tpu.dot_dimension_numbers<[1], [0], [0], [1], [0, 0, 1, 1], [], []>} : vector<16x64xf32>, vector<64x32xf32>, vector<16x32xf32> -> vector<16x32xf32>
    %122 = tpu.reciprocal %121 : vector<16x32xf32> -> vector<16x32xf32>
    %123 = arith.mulf %120, %122 : vector<16x32xf32>
    %cst_66 = arith.constant dense<0.000000e+00> : vector<16x32xf32>
    %124 = tpu.matmul %123, %105, %cst_66 {dimension_numbers = #tpu.dot_dimension_numbers<[1], [0], [0], [1], [0, 0, 1, 1], [], []>} : vector<16x32xf32>, vector<32x32xf32>, vector<16x32xf32> -> vector<16x32xf32>
    %125 = vector.broadcast %106 : vector<1x32xf32> to vector<16x32xf32>
    %126 = arith.addf %124, %125 : vector<16x32xf32>
    %127 = arith.addf %64, %126 : vector<16x32xf32>
    %cst_67 = arith.constant dense<0.000000e+00> : vector<16xf32>
    %128 = vector.multi_reduction <add>, %127, %cst_67 [1] : vector<16x32xf32> to vector<16xf32>
    %129 = vector.shape_cast %128 : vector<16xf32> to vector<16x1xf32>
    %cst_68 = arith.constant 3.200000e+01 : f32
    %130 = vector.broadcast %cst_68 : f32 to vector<16x1xf32>
    %131 = arith.divf %129, %130 : vector<16x1xf32>
    %132 = vector.broadcast %131 : vector<16x1xf32> to vector<16x32xf32>
    %133 = arith.subf %127, %132 : vector<16x32xf32>
    %134 = arith.mulf %133, %133 : vector<16x32xf32>
    %cst_69 = arith.constant dense<0.000000e+00> : vector<16xf32>
    %135 = vector.multi_reduction <add>, %134, %cst_69 [1] : vector<16x32xf32> to vector<16xf32>
    %136 = vector.shape_cast %135 : vector<16xf32> to vector<16x1xf32>
    %cst_70 = arith.constant 0.0322580636 : f32
    %137 = vector.broadcast %cst_70 : f32 to vector<16x1xf32>
    %138 = arith.mulf %136, %137 : vector<16x1xf32>
    %139 = math.sqrt %138 : vector<16x1xf32>
    %cst_71 = arith.constant 9.99999997E-7 : f32
    %140 = vector.broadcast %cst_71 : f32 to vector<16x1xf32>
    %141 = arith.addf %139, %140 : vector<16x1xf32>
    %142 = tpu.reciprocal %141 : vector<16x1xf32> -> vector<16x1xf32>
    %143 = vector.broadcast %131 : vector<16x1xf32> to vector<16x32xf32>
    %144 = arith.subf %127, %143 : vector<16x32xf32>
    %145 = vector.broadcast %142 : vector<16x1xf32> to vector<16x32xf32>
    %146 = arith.mulf %144, %145 : vector<16x32xf32>
    %cst_72 = arith.constant 1.000000e+00 : f32
    %147 = vector.broadcast %cst_72 : f32 to vector<16x32xf32>
    %148 = arith.mulf %147, %146 : vector<16x32xf32>
    %cst_73 = arith.constant 0.000000e+00 : f32
    %149 = vector.broadcast %cst_73 : f32 to vector<16x32xf32>
    %150 = arith.addf %148, %149 : vector<16x32xf32>
    %c0_74 = arith.constant 0 : index
    %c1024 = arith.constant 1024 : index
    %151 = vector.load %arg6[%c0_74, %c1024] : memref<32x1152xf32, #tpu.memory_space<vmem>>, vector<32x64xf32>
    %cst_75 = arith.constant dense<0.000000e+00> : vector<16x64xf32>
    %152 = tpu.matmul %150, %151, %cst_75 {dimension_numbers = #tpu.dot_dimension_numbers<[1], [0], [0], [1], [0, 0, 1, 1], [], []>} : vector<16x32xf32>, vector<32x64xf32>, vector<16x64xf32> -> vector<16x64xf32>
    %c0_76 = arith.constant 0 : index
    %c1024_77 = arith.constant 1024 : index
    %153 = vector.load %arg8[%c0_76, %c1024_77] : memref<1x1280xf32, #tpu.memory_space<vmem>>, vector<1x64xf32>
    %154 = vector.broadcast %153 : vector<1x64xf32> to vector<16x64xf32>
    %155 = arith.addf %152, %154 : vector<16x64xf32>
    %cst_78 = arith.constant 0.000000e+00 : f32
    %156 = vector.broadcast %cst_78 : f32 to vector<16x64xf32>
    %157 = arith.maximumf %155, %156 : vector<16x64xf32>
    %c0_79 = arith.constant 0 : index
    %c0_80 = arith.constant 0 : index
    %158 = vector.load %arg7[%c0_79, %c0_80] : memref<64x32xf32, #tpu.memory_space<vmem>>, vector<64x32xf32>
    %cst_81 = arith.constant dense<0.000000e+00> : vector<16x32xf32>
    %159 = tpu.matmul %157, %158, %cst_81 {dimension_numbers = #tpu.dot_dimension_numbers<[1], [0], [0], [1], [0, 0, 1, 1], [], []>} : vector<16x64xf32>, vector<64x32xf32>, vector<16x32xf32> -> vector<16x32xf32>
    %160 = arith.addf %127, %159 : vector<16x32xf32>
    %c0_82 = arith.constant 0 : index
    %c1152 = arith.constant 1152 : index
    %161 = vector.load %arg8[%c0_82, %c1152] : memref<1x1280xf32, #tpu.memory_space<vmem>>, vector<1x32xf32>
    %162 = vector.broadcast %161 : vector<1x32xf32> to vector<16x32xf32>
    %163 = arith.addf %160, %162 : vector<16x32xf32>
    %c0_83 = arith.constant 0 : index
    %c0_84 = arith.constant 0 : index
    %164 = vector.load %arg9[%c0_83, %c0_84] : memref<16x32xf32, #tpu.memory_space<vmem>>, vector<16x32xf32>
    tpu.vector_store %arg9[%c0_83, %c0_84], %163 {strides = array<i32>} : memref<16x32xf32, #tpu.memory_space<vmem>>, vector<16x32xf32>,
    return
  }
}

</mosaic_0001>

<llo_original>
// kernel: decoder_layer.1
$region0: #{decoder_layer.1}
  #allocation0 [shape = 'u32[]', space=smem, size = 0x4, offset = 0x4, fixed_abs, tag = 'smem constant byte address 0x4 - core index']
  #allocation1 [shape = 'u32[72,128]{1,0:T(1,128)}', space=vmem, size = 0x9000, scoped, tag = 'internal scratch']
  %s0 = inlined_call_operand.vmem [shape: f32[16,32], index: 0, kind: input, shape index: {}]
  %s1 = inlined_call_operand.vmem [shape: f32[16,32], index: 1, kind: input, shape index: {}]
  %s2 = inlined_call_operand.vmem [shape: f32[16,64], index: 2, kind: input, shape index: {}]
  %s3 = inlined_call_operand.vmem [shape: f32[16,64], index: 3, kind: input, shape index: {}]
  %s4 = inlined_call_operand.vmem [shape: f32[64,32], index: 4, kind: input, shape index: {}]
  %s5 = inlined_call_operand.vmem [shape: f32[64,32], index: 5, kind: input, shape index: {}]
  %s6 = inlined_call_operand.hbm [shape: f32[32,1152], index: 6, kind: input, shape index: {}]
  %s7 = inlined_call_operand.vmem [shape: f32[64,32], index: 7, kind: input, shape index: {}]
  %s8 = inlined_call_operand.vmem [shape: f32[1,1280], index: 8, kind: input, shape index: {}]
  %s9 = inlined_call_operand.hbm [shape: f32[16,32], index: 9, kind: output, shape index: {}]
  %s10 = sld [smem:[#allocation0]]
  $region50: #{decoder_layer.1} parent=0
    _
  %s12 = ssub.s32 1, %s10
  %s13 = scalar_select 0, %s12, %s10
  $region1: #{decoder_layer.1} parent=0
    #allocation2 [shape = 'u8[147456]{0}', space=vmem, size = 0x24000, scoped, tag = 'input window, operand 6, single buffered']
    #allocation3 [shape = 's32[1]{0}', space=sflag, size = 0x4, scoped, tag = 'scoped memory for decoder_layer.1']
    #allocation4 [shape = 's32[1]{0}', space=sflag, size = 0x4, scoped, tag = 'scoped memory for decoder_layer.1']
    #allocation5 [shape = 'u8[8192]{0}', space=vmem, size = 0x2000, scoped, tag = 'output window, operand 0, single buffered']
    %14 = vsyncpa [#allocation3], 0
    %15 = vsyncpa [#allocation4], 0
    // Predicated region
    $region2: #{decoder_layer.1} parent=1 // pred_check
      _
    $region3: #{decoder_layer.1} parent=1 // pred_check_branch
      %17 = sbr.rel (0) target = $region5
    $region4: #{decoder_layer.1} parent=1 // pred_region
      _
    $region5: #{decoder_layer.1} parent=1 // pred_fallthru
      _
    // Predicated region
    $region6: #{decoder_layer.1} parent=1 // pred_check
      _
    $region7: #{decoder_layer.1} parent=1 // pred_check_branch
      %19 = sbr.rel (0) target = $region9
    $region8: #{decoder_layer.1} parent=1 // pred_region
      _
    $region9: #{decoder_layer.1} parent=1 // pred_fallthru
      _
    // Predicated region
    $region10: #{decoder_layer.1} parent=1 // pred_check
      _
    $region11: #{decoder_layer.1} parent=1 // pred_check_branch
      %21 = sbr.rel (0) target = $region13
    $region12: #{decoder_layer.1} parent=1 // pred_region
      _
    $region13: #{decoder_layer.1} parent=1 // pred_fallthru
      _
    // Predicated region
    $region14: #{decoder_layer.1} parent=1 // pred_check
      _
    $region15: #{decoder_layer.1} parent=1 // pred_check_branch
      %23 = sbr.rel (0) target = $region17
    $region16: #{decoder_layer.1} parent=1 // pred_region
      _
    $region17: #{decoder_layer.1} parent=1 // pred_fallthru
      _
    // Predicated region
    $region18: #{decoder_layer.1} parent=1 // pred_check
      _
    $region19: #{decoder_layer.1} parent=1 // pred_check_branch
      %25 = sbr.rel (0) target = $region21
    $region20: #{decoder_layer.1} parent=1 // pred_region
      _
    $region21: #{decoder_layer.1} parent=1 // pred_fallthru
      _
    // Predicated region
    $region22: #{decoder_layer.1} parent=1 // pred_check
      _
    $region23: #{decoder_layer.1} parent=1 // pred_check_branch
      %27 = sbr.rel (0) target = $region25
    $region24: #{decoder_layer.1} parent=1 // pred_region
      _
    $region25: #{decoder_layer.1} parent=1 // pred_fallthru
      _
    // Predicated region
    $region26: #{decoder_layer.1} parent=1 // pred_check
      _
    $region27: #{decoder_layer.1} parent=1 // pred_check_branch
      %29 = sbr.rel (0) target = $region29
    $region28: #{decoder_layer.1} parent=1 // pred_region
      %31 = vsyncadd [#allocation3], 0
      %s32 = sshll.u32 %s6, 4
      %s33 = int_to_ptr.hbm [resolvable:$true] %s32
      %s34 = sshll.u32 [#allocation2], 4
      %s35 = int_to_ptr.vmem [resolvable:$true] %s34
      %40 = dma.hbm_to_vmem [thread:$0]  %s33, 4608, %s35, [#allocation3], 1152, 1152, 72
    $region29: #{decoder_layer.1} parent=1 // pred_fallthru
      _
    // Predicated region
    $region30: #{decoder_layer.1} parent=1 // pred_check
      _
    $region31: #{decoder_layer.1} parent=1 // pred_check_branch
      %42 = sbr.rel (0) target = $region33
    $region32: #{decoder_layer.1} parent=1 // pred_region
      _
    $region33: #{decoder_layer.1} parent=1 // pred_fallthru
      _
    // Predicated region
    $region34: #{decoder_layer.1} parent=1 // pred_check
      _
    $region35: #{decoder_layer.1} parent=1 // pred_check_branch
      %44 = sbr.rel (0) target = $region37
    $region36: #{decoder_layer.1} parent=1 // pred_region
      _
    $region37: #{decoder_layer.1} parent=1 // pred_fallthru
      _
    // Predicated region
    $region38: #{decoder_layer.1} parent=1 // pred_check
      _
    $region39: #{decoder_layer.1} parent=1 // pred_check_branch
      %46 = sbr.rel (0) target = $region41
    $region40: #{decoder_layer.1} parent=1 // pred_region
      %48 = dma.done [#allocation3], 4608
    $region41: #{decoder_layer.1} parent=1 // pred_fallthru
      _
    %v49 = vld [vmem:[%s0] sm:$0xff]
    %v50 = vld [vmem:[%s0 + $0x8] sm:$0xff]
    %v51 = vld [vmem:[%s1] sm:$0xff]
    %v52 = vld [vmem:[%s1 + $0x8] sm:$0xff]
    %vm53 = vcmask 261120
    %v54 = vsel %vm53, %v49, 0.0
    %55 = vadd.xlane.f32.xlu0 %v54
    %v56 = vpop.xlane.xlu0 %55
    %v57 = vsel %vm53, %v50, 0.0
    %58 = vadd.xlane.f32.xlu0 %v57
    %v59 = vpop.xlane.xlu0 %58
    %v60 = vrcp.pop 32.0
    %v61 = vmul.f32 32.0, %v60
    %v62 = vsub.f32 1.0, %v61
    %v63 = vmul.f32 %v60, %v62
    %v64 = vadd.f32 %v60, %v63
    %vm65 = vweird.f32 %v60
    %v66 = vsel %vm65, %v60, %v64
    %v67 = vmul.f32 %v56, %v66
    %v68 = vmul.f32 %v59, %v66
    %v69 = vsub.f32 %v49, %v67
    %v70 = vsub.f32 %v50, %v68
    %v71 = vmul.f32 %v69, %v69
    %v72 = vmul.f32 %v70, %v70
    %v73 = vsel %vm53, %v71, 0.0
    %74 = vadd.xlane.f32.xlu0 %v73
    %v75 = vpop.xlane.xlu0 %74
    %v76 = vsel %vm53, %v72, 0.0
    %77 = vadd.xlane.f32.xlu0 %v76
    %v78 = vpop.xlane.xlu0 %77
    %v79 = vmul.f32 %v75, 0.032258064
    %v80 = vmul.f32 %v78, 0.032258064
    %v81 = vrsqrt.pop %v79
    %v82 = vmul.f32 %v81, %v79
    %v83 = vmul.f32 %v82, %v81
    %v84 = vmul.f32 0.5, %v83
    %v85 = vsub.f32 1.5, %v84
    %v86 = vmul.f32 %v81, %v85
    %v87 = vmul.f32 %v79, %v86
    %vm88 = vcmp.eq.f32.partialorder %v79, inf
    %v89 = vsel %vm88, %v79, %v87
    %vm90 = vcmp.eq.f32.partialorder %v79, 0.0
    %v91 = vand.u32 %v79, 2147483648
    %v92 = vsel %vm90, %v91, %v89
    %v93 = vrsqrt.pop %v80
    %v94 = vmul.f32 %v93, %v80
    %v95 = vmul.f32 %v94, %v93
    %v96 = vmul.f32 0.5, %v95
    %v97 = vsub.f32 1.5, %v96
    %v98 = vmul.f32 %v93, %v97
    %v99 = vmul.f32 %v80, %v98
    %vm100 = vcmp.eq.f32.partialorder %v80, inf
    %v101 = vsel %vm100, %v80, %v99
    %vm102 = vcmp.eq.f32.partialorder %v80, 0.0
    %v103 = vand.u32 %v80, 2147483648
    %v104 = vsel %vm102, %v103, %v101
    %v105 = vadd.f32 %v92, 1e-06
    %v106 = vadd.f32 %v104, 1e-06
    %v107 = vrcp.pop %v105
    %v108 = vmul.f32 %v105, %v107
    %v109 = vsub.f32 1.0, %v108
    %v110 = vmul.f32 %v107, %v109
    %v111 = vadd.f32 %v107, %v110
    %vm112 = vweird.f32 %v105
    %vm113 = vweird.f32 %v107
    %vm114 = vmor %vm112, %vm113
    %v115 = vsel %vm114, %v107, %v111
    %v116 = vand.u32 2147483647, %v105
    %vm117 = vcmp.eq.f32.partialorder %v116, 8.507059e+37
    %v118 = vand.u32 %v105, 2147483648
    %v119 = vor.u32 1.1754944e-38, %v118
    %v120 = vsel %vm117, %v119, %v115
    %v121 = vrcp.pop %v106
    %v122 = vmul.f32 %v106, %v121
    %v123 = vsub.f32 1.0, %v122
    %v124 = vmul.f32 %v121, %v123
    %v125 = vadd.f32 %v121, %v124
    %vm126 = vweird.f32 %v106
    %vm127 = vweird.f32 %v121
    %vm128 = vmor %vm126, %vm127
    %v129 = vsel %vm128, %v121, %v125
    %v130 = vand.u32 2147483647, %v106
    %vm131 = vcmp.eq.f32.partialorder %v130, 8.507059e+37
    %v132 = vand.u32 %v106, 2147483648
    %v133 = vor.u32 1.1754944e-38, %v132
    %v134 = vsel %vm131, %v133, %v129
    %v135 = vmul.f32 %v69, %v120
    %v136 = vmul.f32 %v70, %v134
    %v137 = vadd.f32 %v135, 0.0
    %v138 = vadd.f32 %v136, 0.0
    %v139 = vld [vmem:[#allocation2] sm:$0xff]
    %v140 = vld [vmem:[#allocation2 + $0x48] sm:$0xff]
    %v141 = vld [vmem:[#allocation2 + $0x90] sm:$0xff]
    %v142 = vld [vmem:[#allocation2 + $0xd8] sm:$0xff]
    %v143 = vld [vmem:[%s8] sm:$0x1]
    %v145 = vperm.slane %v143, 0
    %v148 = vsel %vm53, %v137, 0
    %v151 = vsel %vm53, %v138, 0
    %153 = vmatpush.msra.mxu0 0.0
    %154 = vmatpush.msra.mxu0 0.0
    %155 = vmatpush.msra.mxu0 0.0
    %156 = vmatpush.msra.mxu0 0.0
    %157 = vmatpush.msra.mxu0 0.0
    %158 = vmatpush.msra.mxu0 0.0
    %159 = vmatpush.msra.mxu0 0.0
    %160 = vmatpush.msra.mxu0 0.0
    %161 = vmatpush.msra.mxu0 0.0
    %162 = vmatpush.msra.mxu0 0.0
    %163 = vmatpush.msra.mxu0 0.0
    %164 = vmatpush.msra.mxu0 0.0
    %165 = vmatpush.msra.mxu0 %v142
    %166 = vmatpush.msra.mxu0 %v141
    %167 = vmatpush.msra.mxu0 %v140
    %168 = vmatpush.msra.mxu0 %v139
    %169 = vmatmul.f32.gmra.mxu0 %v148
    %v170 = vpop.f32.mrf.mxu0
    %v171 = vadd.f32 %v145, %v170
    %172 = vmatmul.f32.gmra.mxu0 %v151
    %v173 = vpop.f32.mrf.mxu0
    %v174 = vadd.f32 %v145, %v173
    %175 = vdwg.mxu0
    %v176 = vld [vmem:[#allocation2 + $0x8] sm:$0xff]
    %v177 = vld [vmem:[#allocation2 + $0x50] sm:$0xff]
    %v178 = vld [vmem:[#allocation2 + $0x98] sm:$0xff]
    %v179 = vld [vmem:[#allocation2 + $0xe0] sm:$0xff]
    %v180 = vld [vmem:[%s8 + $0x1] sm:$0x1]
    %v182 = vperm.slane %v180, 0
    %184 = vmatpush.msra.mxu0 0.0
    %185 = vmatpush.msra.mxu0 0.0
    %186 = vmatpush.msra.mxu0 0.0
    %187 = vmatpush.msra.mxu0 0.0
    %188 = vmatpush.msra.mxu0 0.0
    %189 = vmatpush.msra.mxu0 0.0
    %190 = vmatpush.msra.mxu0 0.0
    %191 = vmatpush.msra.mxu0 0.0
    %192 = vmatpush.msra.mxu0 0.0
    %193 = vmatpush.msra.mxu0 0.0
    %194 = vmatpush.msra.mxu0 0.0
    %195 = vmatpush.msra.mxu0 0.0
    %196 = vmatpush.msra.mxu0 %v179
    %197 = vmatpush.msra.mxu0 %v178
    %198 = vmatpush.msra.mxu0 %v177
    %199 = vmatpush.msra.mxu0 %v176
    %200 = vmatmul.f32.gmra.mxu0 %v148
    %v201 = vpop.f32.mrf.mxu0
    %v202 = vadd.f32 %v182, %v201
    %203 = vmatmul.f32.gmra.mxu0 %v151
    %v204 = vpop.f32.mrf.mxu0
    %v205 = vadd.f32 %v182, %v204
    %206 = vdwg.mxu0
    %v207 = vld [vmem:[#allocation2 + $0x10] sm:$0xff]
    %v208 = vld [vmem:[#allocation2 + $0x58] sm:$0xff]
    %v209 = vld [vmem:[#allocation2 + $0xa0] sm:$0xff]
    %v210 = vld [vmem:[#allocation2 + $0xe8] sm:$0xff]
    %v211 = vld [vmem:[%s8 + $0x2] sm:$0x1]
    %v213 = vperm.slane %v211, 0
    %215 = vmatpush.msra.mxu0 0.0
    %216 = vmatpush.msra.mxu0 0.0
    %217 = vmatpush.msra.mxu0 0.0
    %218 = vmatpush.msra.mxu0 0.0
    %219 = vmatpush.msra.mxu0 0.0
    %220 = vmatpush.msra.mxu0 0.0
    %221 = vmatpush.msra.mxu0 0.0
    %222 = vmatpush.msra.mxu0 0.0
    %223 = vmatpush.msra.mxu0 0.0
    %224 = vmatpush.msra.mxu0 0.0
    %225 = vmatpush.msra.mxu0 0.0
    %226 = vmatpush.msra.mxu0 0.0
    %227 = vmatpush.msra.mxu0 %v210
    %228 = vmatpush.msra.mxu0 %v209
    %229 = vmatpush.msra.mxu0 %v208
    %230 = vmatpush.msra.mxu0 %v207
    %231 = vmatmul.f32.gmra.mxu0 %v148
    %v232 = vpop.f32.mrf.mxu0
    %v233 = vadd.f32 %v213, %v232
    %234 = vmatmul.f32.gmra.mxu0 %v151
    %v235 = vpop.f32.mrf.mxu0
    %v236 = vadd.f32 %v213, %v235
    %237 = vdwg.mxu0
    %v238 = vld [vmem:[%s2] sm:$0xff]
    %v239 = vld [vmem:[%s2 + $0x8] sm:$0xff]
    %v240 = vld [vmem:[%s4] sm:$0xff]
    %v241 = vld [vmem:[%s4 + $0x8] sm:$0xff]
    %v242 = vld [vmem:[%s4 + $0x10] sm:$0xff]
    %v243 = vld [vmem:[%s4 + $0x18] sm:$0xff]
    %v244 = vld [vmem:[%s4 + $0x20] sm:$0xff]
    %v245 = vld [vmem:[%s4 + $0x28] sm:$0xff]
    %v246 = vld [vmem:[%s4 + $0x30] sm:$0xff]
    %v247 = vld [vmem:[%s4 + $0x38] sm:$0xff]
    %v248 = vld [vmem:[#allocation2 + $0x18] sm:$0xff]
    %v249 = vld [vmem:[#allocation2 + $0x60] sm:$0xff]
    %v250 = vld [vmem:[#allocation2 + $0xa8] sm:$0xff]
    %v251 = vld [vmem:[#allocation2 + $0xf0] sm:$0xff]
    %v252 = vld [vmem:[%s8 + $0x3] sm:$0x1]
    %v253 = vmul.f32 %v202, %v240
    %v254 = vmul.f32 %v205, %v241
    %v255 = vmul.f32 %v202, %v242
    %v256 = vmul.f32 %v205, %v243
    %v257 = vmul.f32 %v202, %v244
    %v258 = vmul.f32 %v205, %v245
    %v259 = vmul.f32 %v202, %v246
    %v260 = vmul.f32 %v205, %v247
    %v261 = vmul.f32 %v233, %v240
    %v262 = vmul.f32 %v236, %v241
    %v263 = vmul.f32 %v233, %v242
    %v264 = vmul.f32 %v236, %v243
    %v265 = vmul.f32 %v233, %v244
    %v266 = vmul.f32 %v236, %v245
    %v267 = vmul.f32 %v233, %v246
    %v268 = vmul.f32 %v236, %v247
    %v270 = vsel %vm53, %v171, 0
    %v273 = vsel %vm53, %v174, 0
    %v276 = vsel %vm53, %v253, 0
    %v279 = vsel %vm53, %v254, 0
    %v282 = vsel %vm53, %v255, 0
    %v285 = vsel %vm53, %v256, 0
    %v288 = vsel %vm53, %v257, 0
    %v291 = vsel %vm53, %v258, 0
    %v294 = vsel %vm53, %v259, 0
    %v297 = vsel %vm53, %v260, 0
    %299 = vmatpush.xpose.msra.mxu0 0.0
    %300 = vmatpush.xpose.msra.mxu0 0.0
    %301 = vmatpush.xpose.msra.mxu0 0.0
    %302 = vmatpush.xpose.msra.mxu0 0.0
    %303 = vmatpush.xpose.msra.mxu0 0.0
    %304 = vmatpush.xpose.msra.mxu0 0.0
    %305 = vmatpush.xpose.msra.mxu0 0.0
    %306 = vmatpush.xpose.msra.mxu0 0.0
    %307 = vmatpush.xpose.msra.mxu0 %v297
    %308 = vmatpush.xpose.msra.mxu0 %v294
    %309 = vmatpush.xpose.msra.mxu0 %v291
    %310 = vmatpush.xpose.msra.mxu0 %v288
    %311 = vmatpush.xpose.msra.mxu0 %v285
    %312 = vmatpush.xpose.msra.mxu0 %v282
    %313 = vmatpush.xpose.msra.mxu0 %v279
    %314 = vmatpush.xpose.msra.mxu0 %v276
    %315 = vmatmul.f32.gmra.mxu0 %v270
    %v316 = vpop.f32.mrf.mxu0
    %v317 = vadd.f32 0.0, %v316
    %318 = vmatmul.f32.gmra.mxu0 %v273
    %v319 = vpop.f32.mrf.mxu0
    %v320 = vadd.f32 0.0, %v319
    %321 = vdwg.mxu0
    %v322 = vmul.f32 %v317, 0.35355338
    %v323 = vmul.f32 %v320, 0.35355338
    %v324 = vadd.f32 %v322, %v238
    %v325 = vadd.f32 %v323, %v239
    %vm326 = vcmask 523264
    %v327 = vsel %vm326, %v324, -inf
    %328 = vmax.xlane.f32.xlu0 %v327
    %v329 = vpop.xlane.xlu0 %328
    %v330 = vsel %vm326, %v325, -inf
    %331 = vmax.xlane.f32.xlu0 %v330
    %v332 = vpop.xlane.xlu0 %331
    %v333 = vsub.f32 %v324, %v329
    %v334 = vsub.f32 %v325, %v332
    %v335 = vmul.f32 %v333, 1.442695
    %v336 = vpow.pop %v335
    %v337 = vmul.f32 %v334, 1.442695
    %v338 = vpow.pop %v337
    %v340 = vsel %vm326, %v336, 0
    %v343 = vsel %vm326, %v338, 0
    %345 = vmatpush.msra.mxu0 0.0
    %346 = vmatpush.msra.mxu0 0.0
    %347 = vmatpush.msra.mxu0 0.0
    %348 = vmatpush.msra.mxu0 0.0
    %349 = vmatpush.msra.mxu0 0.0
    %350 = vmatpush.msra.mxu0 0.0
    %351 = vmatpush.msra.mxu0 0.0
    %352 = vmatpush.msra.mxu0 0.0
    %353 = vmatpush.msra.mxu0 %v268
    %354 = vmatpush.msra.mxu0 %v267
    %355 = vmatpush.msra.mxu0 %v266
    %356 = vmatpush.msra.mxu0 %v265
    %357 = vmatpush.msra.mxu0 %v264
    %358 = vmatpush.msra.mxu0 %v263
    %359 = vmatpush.msra.mxu0 %v262
    %360 = vmatpush.msra.mxu0 %v261
    %361 = vmatmul.f32.gmra.mxu0 %v340
    %v362 = vpop.f32.mrf.mxu0
    %v363 = vadd.f32 0.0, %v362
    %364 = vmatmul.f32.gmra.mxu0 %v343
    %v365 = vpop.f32.mrf.mxu0
    %v366 = vadd.f32 0.0, %v365
    %367 = vdwg.mxu0
    %368 = vmatpush.msra.mxu0 0.0
    %369 = vmatpush.msra.mxu0 0.0
    %370 = vmatpush.msra.mxu0 0.0
    %371 = vmatpush.msra.mxu0 0.0
    %372 = vmatpush.msra.mxu0 0.0
    %373 = vmatpush.msra.mxu0 0.0
    %374 = vmatpush.msra.mxu0 0.0
    %375 = vmatpush.msra.mxu0 0.0
    %376 = vmatpush.msra.mxu0 %v247
    %377 = vmatpush.msra.mxu0 %v246
    %378 = vmatpush.msra.mxu0 %v245
    %379 = vmatpush.msra.mxu0 %v244
    %380 = vmatpush.msra.mxu0 %v243
    %381 = vmatpush.msra.mxu0 %v242
    %382 = vmatpush.msra.mxu0 %v241
    %383 = vmatpush.msra.mxu0 %v240
    %384 = vmatmul.f32.gmra.mxu0 %v340
    %v385 = vpop.f32.mrf.mxu0
    %v386 = vadd.f32 0.0, %v385
    %387 = vmatmul.f32.gmra.mxu0 %v343
    %v388 = vpop.f32.mrf.mxu0
    %v389 = vadd.f32 0.0, %v388
    %390 = vdwg.mxu0
    %v391 = vrcp.pop %v386
    %v392 = vmul.f32 %v386, %v391
    %v393 = vsub.f32 1.0, %v392
    %v394 = vmul.f32 %v391, %v393
    %v395 = vadd.f32 %v391, %v394
    %vm396 = vweird.f32 %v386
    %vm397 = vweird.f32 %v391
    %vm398 = vmor %vm396, %vm397
    %v399 = vsel %vm398, %v391, %v395
    %v400 = vand.u32 2147483647, %v386
    %vm401 = vcmp.eq.f32.partialorder %v400, 8.507059e+37
    %v402 = vand.u32 %v386, 2147483648
    %v403 = vor.u32 1.1754944e-38, %v402
    %v404 = vsel %vm401, %v403, %v399
    %v405 = vrcp.pop %v389
    %v406 = vmul.f32 %v389, %v405
    %v407 = vsub.f32 1.0, %v406
    %v408 = vmul.f32 %v405, %v407
    %v409 = vadd.f32 %v405, %v408
    %vm410 = vweird.f32 %v389
    %vm411 = vweird.f32 %v405
    %vm412 = vmor %vm410, %vm411
    %v413 = vsel %vm412, %v405, %v409
    %v414 = vand.u32 2147483647, %v389
    %vm415 = vcmp.eq.f32.partialorder %v414, 8.507059e+37
    %v416 = vand.u32 %v389, 2147483648
    %v417 = vor.u32 1.1754944e-38, %v416
    %v418 = vsel %vm415, %v417, %v413
    %v419 = vmul.f32 %v363, %v404
    %v420 = vmul.f32 %v366, %v418
    %v422 = vperm.slane %v252, 0
    %v425 = vsel %vm53, %v419, 0
    %v428 = vsel %vm53, %v420, 0
    %430 = vmatpush.msra.mxu0 0.0
    %431 = vmatpush.msra.mxu0 0.0
    %432 = vmatpush.msra.mxu0 0.0
    %433 = vmatpush.msra.mxu0 0.0
    %434 = vmatpush.msra.mxu0 0.0
    %435 = vmatpush.msra.mxu0 0.0
    %436 = vmatpush.msra.mxu0 0.0
    %437 = vmatpush.msra.mxu0 0.0
    %438 = vmatpush.msra.mxu0 0.0
    %439 = vmatpush.msra.mxu0 0.0
    %440 = vmatpush.msra.mxu0 0.0
    %441 = vmatpush.msra.mxu0 0.0
    %442 = vmatpush.msra.mxu0 %v251
    %443 = vmatpush.msra.mxu0 %v250
    %444 = vmatpush.msra.mxu0 %v249
    %445 = vmatpush.msra.mxu0 %v248
    %446 = vmatmul.f32.gmra.mxu0 %v425
    %v447 = vpop.f32.mrf.mxu0
    %v448 = vadd.f32 %v422, %v447
    %449 = vmatmul.f32.gmra.mxu0 %v428
    %v450 = vpop.f32.mrf.mxu0
    %v451 = vadd.f32 %v422, %v450
    %452 = vdwg.mxu0
    %v453 = vadd.f32 %v49, %v448
    %v454 = vadd.f32 %v50, %v451
    %v455 = vsel %vm53, %v453, 0.0
    %456 = vadd.xlane.f32.xlu0 %v455
    %v457 = vpop.xlane.xlu0 %456
    %v458 = vsel %vm53, %v454, 0.0
    %459 = vadd.xlane.f32.xlu0 %v458
    %v460 = vpop.xlane.xlu0 %459
    %v461 = vmul.f32 %v457, %v66
    %v462 = vmul.f32 %v460, %v66
    %v463 = vsub.f32 %v453, %v461
    %v464 = vsub.f32 %v454, %v462
    %v465 = vmul.f32 %v463, %v463
    %v466 = vmul.f32 %v464, %v464
    %v467 = vsel %vm53, %v465, 0.0
    %468 = vadd.xlane.f32.xlu0 %v467
    %v469 = vpop.xlane.xlu0 %468
    %v470 = vsel %vm53, %v466, 0.0
    %471 = vadd.xlane.f32.xlu0 %v470
    %v472 = vpop.xlane.xlu0 %471
    %v473 = vmul.f32 %v469, 0.032258064
    %v474 = vmul.f32 %v472, 0.032258064
    %v475 = vrsqrt.pop %v473
    %v476 = vmul.f32 %v475, %v473
    %v477 = vmul.f32 %v476, %v475
    %v478 = vmul.f32 0.5, %v477
    %v479 = vsub.f32 1.5, %v478
    %v480 = vmul.f32 %v475, %v479
    %v481 = vmul.f32 %v473, %v480
    %vm482 = vcmp.eq.f32.partialorder %v473, inf
    %v483 = vsel %vm482, %v473, %v481
    %vm484 = vcmp.eq.f32.partialorder %v473, 0.0
    %v485 = vand.u32 %v473, 2147483648
    %v486 = vsel %vm484, %v485, %v483
    %v487 = vrsqrt.pop %v474
    %v488 = vmul.f32 %v487, %v474
    %v489 = vmul.f32 %v488, %v487
    %v490 = vmul.f32 0.5, %v489
    %v491 = vsub.f32 1.5, %v490
    %v492 = vmul.f32 %v487, %v491
    %v493 = vmul.f32 %v474, %v492
    %vm494 = vcmp.eq.f32.partialorder %v474, inf
    %v495 = vsel %vm494, %v474, %v493
    %vm496 = vcmp.eq.f32.partialorder %v474, 0.0
    %v497 = vand.u32 %v474, 2147483648
    %v498 = vsel %vm496, %v497, %v495
    %v499 = vadd.f32 %v486, 1e-06
    %v500 = vadd.f32 %v498, 1e-06
    %v501 = vrcp.pop %v499
    %v502 = vmul.f32 %v499, %v501
    %v503 = vsub.f32 1.0, %v502
    %v504 = vmul.f32 %v501, %v503
    %v505 = vadd.f32 %v501, %v504
    %vm506 = vweird.f32 %v499
    %vm507 = vweird.f32 %v501
    %vm508 = vmor %vm506, %vm507
    %v509 = vsel %vm508, %v501, %v505
    %v510 = vand.u32 2147483647, %v499
    %vm511 = vcmp.eq.f32.partialorder %v510, 8.507059e+37
    %v512 = vand.u32 %v499, 2147483648
    %v513 = vor.u32 1.1754944e-38, %v512
    %v514 = vsel %vm511, %v513, %v509
    %v515 = vrcp.pop %v500
    %v516 = vmul.f32 %v500, %v515
    %v517 = vsub.f32 1.0, %v516
    %v518 = vmul.f32 %v515, %v517
    %v519 = vadd.f32 %v515, %v518
    %vm520 = vweird.f32 %v500
    %vm521 = vweird.f32 %v515
    %vm522 = vmor %vm520, %vm521
    %v523 = vsel %vm522, %v515, %v519
    %v524 = vand.u32 2147483647, %v500
    %vm525 = vcmp.eq.f32.partialorder %v524, 8.507059e+37
    %v526 = vand.u32 %v500, 2147483648
    %v527 = vor.u32 1.1754944e-38, %v526
    %v528 = vsel %vm525, %v527, %v523
    %v529 = vmul.f32 %v463, %v514
    %v530 = vmul.f32 %v464, %v528
    %v531 = vadd.f32 %v529, 0.0
    %v532 = vadd.f32 %v530, 0.0
    %v533 = vld [vmem:[#allocation2 + $0x20] sm:$0xff]
    %v534 = vld [vmem:[#allocation2 + $0x68] sm:$0xff]
    %v535 = vld [vmem:[#allocation2 + $0xb0] sm:$0xff]
    %v536 = vld [vmem:[#allocation2 + $0xf8] sm:$0xff]
    %v537 = vld [vmem:[%s8 + $0x4] sm:$0x1]
    %v539 = vperm.slane %v537, 0
    %v542 = vsel %vm53, %v531, 0
    %v545 = vsel %vm53, %v532, 0
    %547 = vmatpush.msra.mxu0 0.0
    %548 = vmatpush.msra.mxu0 0.0
    %549 = vmatpush.msra.mxu0 0.0
    %550 = vmatpush.msra.mxu0 0.0
    %551 = vmatpush.msra.mxu0 0.0
    %552 = vmatpush.msra.mxu0 0.0
    %553 = vmatpush.msra.mxu0 0.0
    %554 = vmatpush.msra.mxu0 0.0
    %555 = vmatpush.msra.mxu0 0.0
    %556 = vmatpush.msra.mxu0 0.0
    %557 = vmatpush.msra.mxu0 0.0
    %558 = vmatpush.msra.mxu0 0.0
    %559 = vmatpush.msra.mxu0 %v536
    %560 = vmatpush.msra.mxu0 %v535
    %561 = vmatpush.msra.mxu0 %v534
    %562 = vmatpush.msra.mxu0 %v533
    %563 = vmatmul.f32.gmra.mxu0 %v542
    %v564 = vpop.f32.mrf.mxu0
    %v565 = vadd.f32 %v539, %v564
    %566 = vmatmul.f32.gmra.mxu0 %v545
    %v567 = vpop.f32.mrf.mxu0
    %v568 = vadd.f32 %v539, %v567
    %569 = vdwg.mxu0
    %v570 = vld [vmem:[#allocation2 + $0x28] sm:$0xff]
    %v571 = vld [vmem:[#allocation2 + $0x70] sm:$0xff]
    %v572 = vld [vmem:[#allocation2 + $0xb8] sm:$0xff]
    %v573 = vld [vmem:[#allocation2 + $0x100] sm:$0xff]
    %v574 = vld [vmem:[%s8 + $0x5] sm:$0x1]
    %v576 = vperm.slane %v574, 0
    %v579 = vsel %vm53, %v51, 0
    %v582 = vsel %vm53, %v52, 0
    %584 = vmatpush.msra.mxu0 0.0
    %585 = vmatpush.msra.mxu0 0.0
    %586 = vmatpush.msra.mxu0 0.0
    %587 = vmatpush.msra.mxu0 0.0
    %588 = vmatpush.msra.mxu0 0.0
    %589 = vmatpush.msra.mxu0 0.0
    %590 = vmatpush.msra.mxu0 0.0
    %591 = vmatpush.msra.mxu0 0.0
    %592 = vmatpush.msra.mxu0 0.0
    %593 = vmatpush.msra.mxu0 0.0
    %594 = vmatpush.msra.mxu0 0.0
    %595 = vmatpush.msra.mxu0 0.0
    %596 = vmatpush.msra.mxu0 %v573
    %597 = vmatpush.msra.mxu0 %v572
    %598 = vmatpush.msra.mxu0 %v571
    %599 = vmatpush.msra.mxu0 %v570
    %600 = vmatmul.f32.gmra.mxu0 %v579
    %v601 = vpop.f32.mrf.mxu0
    %v602 = vadd.f32 %v576, %v601
    %603 = vmatmul.f32.gmra.mxu0 %v582
    %v604 = vpop.f32.mrf.mxu0
    %v605 = vadd.f32 %v576, %v604
    %606 = vdwg.mxu0
    %v607 = vld [vmem:[#allocation2 + $0x30] sm:$0xff]
    %v608 = vld [vmem:[#allocation2 + $0x78] sm:$0xff]
    %v609 = vld [vmem:[#allocation2 + $0xc0] sm:$0xff]
    %v610 = vld [vmem:[#allocation2 + $0x108] sm:$0xff]
    %v611 = vld [vmem:[%s8 + $0x6] sm:$0x1]
    %v613 = vperm.slane %v611, 0
    %615 = vmatpush.msra.mxu0 0.0
    %616 = vmatpush.msra.mxu0 0.0
    %617 = vmatpush.msra.mxu0 0.0
    %618 = vmatpush.msra.mxu0 0.0
    %619 = vmatpush.msra.mxu0 0.0
    %620 = vmatpush.msra.mxu0 0.0
    %621 = vmatpush.msra.mxu0 0.0
    %622 = vmatpush.msra.mxu0 0.0
    %623 = vmatpush.msra.mxu0 0.0
    %624 = vmatpush.msra.mxu0 0.0
    %625 = vmatpush.msra.mxu0 0.0
    %626 = vmatpush.msra.mxu0 0.0
    %627 = vmatpush.msra.mxu0 %v610
    %628 = vmatpush.msra.mxu0 %v609
    %629 = vmatpush.msra.mxu0 %v608
    %630 = vmatpush.msra.mxu0 %v607
    %631 = vmatmul.f32.gmra.mxu0 %v579
    %v632 = vpop.f32.mrf.mxu0
    %v633 = vadd.f32 %v613, %v632
    %634 = vmatmul.f32.gmra.mxu0 %v582
    %v635 = vpop.f32.mrf.mxu0
    %v636 = vadd.f32 %v613, %v635
    %637 = vdwg.mxu0
    %v638 = vld [vmem:[%s3] sm:$0xff]
    %v639 = vld [vmem:[%s3 + $0x8] sm:$0xff]
    %v640 = vld [vmem:[%s5] sm:$0xff]
    %v641 = vld [vmem:[%s5 + $0x8] sm:$0xff]
    %v642 = vld [vmem:[%s5 + $0x10] sm:$0xff]
    %v643 = vld [vmem:[%s5 + $0x18] sm:$0xff]
    %v644 = vld [vmem:[%s5 + $0x20] sm:$0xff]
    %v645 = vld [vmem:[%s5 + $0x28] sm:$0xff]
    %v646 = vld [vmem:[%s5 + $0x30] sm:$0xff]
    %v647 = vld [vmem:[%s5 + $0x38] sm:$0xff]
    %v648 = vld [vmem:[#allocation2 + $0x38] sm:$0xff]
    %v649 = vld [vmem:[#allocation2 + $0x80] sm:$0xff]
    %v650 = vld [vmem:[#allocation2 + $0xc8] sm:$0xff]
    %v651 = vld [vmem:[#allocation2 + $0x110] sm:$0xff]
    %v652 = vld [vmem:[%s8 + $0x7] sm:$0x1]
    %v653 = vmul.f32 %v602, %v640
    %v654 = vmul.f32 %v605, %v641
    %v655 = vmul.f32 %v602, %v642
    %v656 = vmul.f32 %v605, %v643
    %v657 = vmul.f32 %v602, %v644
    %v658 = vmul.f32 %v605, %v645
    %v659 = vmul.f32 %v602, %v646
    %v660 = vmul.f32 %v605, %v647
    %v661 = vmul.f32 %v633, %v640
    %v662 = vmul.f32 %v636, %v641
    %v663 = vmul.f32 %v633, %v642
    %v664 = vmul.f32 %v636, %v643
    %v665 = vmul.f32 %v633, %v644
    %v666 = vmul.f32 %v636, %v645
    %v667 = vmul.f32 %v633, %v646
    %v668 = vmul.f32 %v636, %v647
    %v670 = vsel %vm53, %v565, 0
    %v673 = vsel %vm53, %v568, 0
    %v676 = vsel %vm53, %v653, 0
    %v679 = vsel %vm53, %v654, 0
    %v682 = vsel %vm53, %v655, 0
    %v685 = vsel %vm53, %v656, 0
    %v688 = vsel %vm53, %v657, 0
    %v691 = vsel %vm53, %v658, 0
    %v694 = vsel %vm53, %v659, 0
    %v697 = vsel %vm53, %v660, 0
    %699 = vmatpush.xpose.msra.mxu0 0.0
    %700 = vmatpush.xpose.msra.mxu0 0.0
    %701 = vmatpush.xpose.msra.mxu0 0.0
    %702 = vmatpush.xpose.msra.mxu0 0.0
    %703 = vmatpush.xpose.msra.mxu0 0.0
    %704 = vmatpush.xpose.msra.mxu0 0.0
    %705 = vmatpush.xpose.msra.mxu0 0.0
    %706 = vmatpush.xpose.msra.mxu0 0.0
    %707 = vmatpush.xpose.msra.mxu0 %v697
    %708 = vmatpush.xpose.msra.mxu0 %v694
    %709 = vmatpush.xpose.msra.mxu0 %v691
    %710 = vmatpush.xpose.msra.mxu0 %v688
    %711 = vmatpush.xpose.msra.mxu0 %v685
    %712 = vmatpush.xpose.msra.mxu0 %v682
    %713 = vmatpush.xpose.msra.mxu0 %v679
    %714 = vmatpush.xpose.msra.mxu0 %v676
    %715 = vmatmul.f32.gmra.mxu0 %v670
    %v716 = vpop.f32.mrf.mxu0
    %v717 = vadd.f32 0.0, %v716
    %718 = vmatmul.f32.gmra.mxu0 %v673
    %v719 = vpop.f32.mrf.mxu0
    %v720 = vadd.f32 0.0, %v719
    %721 = vdwg.mxu0
    %v722 = vmul.f32 %v717, 0.35355338
    %v723 = vmul.f32 %v720, 0.35355338
    %v724 = vadd.f32 %v722, %v638
    %v725 = vadd.f32 %v723, %v639
    %v726 = vsel %vm326, %v724, -inf
    %727 = vmax.xlane.f32.xlu0 %v726
    %v728 = vpop.xlane.xlu0 %727
    %v729 = vsel %vm326, %v725, -inf
    %730 = vmax.xlane.f32.xlu0 %v729
    %v731 = vpop.xlane.xlu0 %730
    %v732 = vsub.f32 %v724, %v728
    %v733 = vsub.f32 %v725, %v731
    %v734 = vmul.f32 %v732, 1.442695
    %v735 = vpow.pop %v734
    %v736 = vmul.f32 %v733, 1.442695
    %v737 = vpow.pop %v736
    %v739 = vsel %vm326, %v735, 0
    %v742 = vsel %vm326, %v737, 0
    %744 = vmatpush.msra.mxu0 0.0
    %745 = vmatpush.msra.mxu0 0.0
    %746 = vmatpush.msra.mxu0 0.0
    %747 = vmatpush.msra.mxu0 0.0
    %748 = vmatpush.msra.mxu0 0.0
    %749 = vmatpush.msra.mxu0 0.0
    %750 = vmatpush.msra.mxu0 0.0
    %751 = vmatpush.msra.mxu0 0.0
    %752 = vmatpush.msra.mxu0 %v668
    %753 = vmatpush.msra.mxu0 %v667
    %754 = vmatpush.msra.mxu0 %v666
    %755 = vmatpush.msra.mxu0 %v665
    %756 = vmatpush.msra.mxu0 %v664
    %757 = vmatpush.msra.mxu0 %v663
    %758 = vmatpush.msra.mxu0 %v662
    %759 = vmatpush.msra.mxu0 %v661
    %760 = vmatmul.f32.gmra.mxu0 %v739
    %v761 = vpop.f32.mrf.mxu0
    %v762 = vadd.f32 0.0, %v761
    %763 = vmatmul.f32.gmra.mxu0 %v742
    %v764 = vpop.f32.mrf.mxu0
    %v765 = vadd.f32 0.0, %v764
    %766 = vdwg.mxu0
    %767 = vmatpush.msra.mxu0 0.0
    %768 = vmatpush.msra.mxu0 0.0
    %769 = vmatpush.msra.mxu0 0.0
    %770 = vmatpush.msra.mxu0 0.0
    %771 = vmatpush.msra.mxu0 0.0
    %772 = vmatpush.msra.mxu0 0.0
    %773 = vmatpush.msra.mxu0 0.0
    %774 = vmatpush.msra.mxu0 0.0
    %775 = vmatpush.msra.mxu0 %v647
    %776 = vmatpush.msra.mxu0 %v646
    %777 = vmatpush.msra.mxu0 %v645
    %778 = vmatpush.msra.mxu0 %v644
    %779 = vmatpush.msra.mxu0 %v643
    %780 = vmatpush.msra.mxu0 %v642
    %781 = vmatpush.msra.mxu0 %v641
    %782 = vmatpush.msra.mxu0 %v640
    %783 = vmatmul.f32.gmra.mxu0 %v739
    %v784 = vpop.f32.mrf.mxu0
    %v785 = vadd.f32 0.0, %v784
    %786 = vmatmul.f32.gmra.mxu0 %v742
    %v787 = vpop.f32.mrf.mxu0
    %v788 = vadd.f32 0.0, %v787
    %789 = vdwg.mxu0
    %v790 = vrcp.pop %v785
    %v791 = vmul.f32 %v785, %v790
    %v792 = vsub.f32 1.0, %v791
    %v793 = vmul.f32 %v790, %v792
    %v794 = vadd.f32 %v790, %v793
    %vm795 = vweird.f32 %v785
    %vm796 = vweird.f32 %v790
    %vm797 = vmor %vm795, %vm796
    %v798 = vsel %vm797, %v790, %v794
    %v799 = vand.u32 2147483647, %v785
    %vm800 = vcmp.eq.f32.partialorder %v799, 8.507059e+37
    %v801 = vand.u32 %v785, 2147483648
    %v802 = vor.u32 1.1754944e-38, %v801
    %v803 = vsel %vm800, %v802, %v798
    %v804 = vrcp.pop %v788
    %v805 = vmul.f32 %v788, %v804
    %v806 = vsub.f32 1.0, %v805
    %v807 = vmul.f32 %v804, %v806
    %v808 = vadd.f32 %v804, %v807
    %vm809 = vweird.f32 %v788
    %vm810 = vweird.f32 %v804
    %vm811 = vmor %vm809, %vm810
    %v812 = vsel %vm811, %v804, %v808
    %v813 = vand.u32 2147483647, %v788
    %vm814 = vcmp.eq.f32.partialorder %v813, 8.507059e+37
    %v815 = vand.u32 %v788, 2147483648
    %v816 = vor.u32 1.1754944e-38, %v815
    %v817 = vsel %vm814, %v816, %v812
    %v818 = vmul.f32 %v762, %v803
    %v819 = vmul.f32 %v765, %v817
    %v821 = vperm.slane %v652, 0
    %v824 = vsel %vm53, %v818, 0
    %v827 = vsel %vm53, %v819, 0
    %829 = vmatpush.msra.mxu0 0.0
    %830 = vmatpush.msra.mxu0 0.0
    %831 = vmatpush.msra.mxu0 0.0
    %832 = vmatpush.msra.mxu0 0.0
    %833 = vmatpush.msra.mxu0 0.0
    %834 = vmatpush.msra.mxu0 0.0
    %835 = vmatpush.msra.mxu0 0.0
    %836 = vmatpush.msra.mxu0 0.0
    %837 = vmatpush.msra.mxu0 0.0
    %838 = vmatpush.msra.mxu0 0.0
    %839 = vmatpush.msra.mxu0 0.0
    %840 = vmatpush.msra.mxu0 0.0
    %841 = vmatpush.msra.mxu0 %v651
    %842 = vmatpush.msra.mxu0 %v650
    %843 = vmatpush.msra.mxu0 %v649
    %844 = vmatpush.msra.mxu0 %v648
    %845 = vmatmul.f32.gmra.mxu0 %v824
    %v846 = vpop.f32.mrf.mxu0
    %v847 = vadd.f32 %v821, %v846
    %848 = vmatmul.f32.gmra.mxu0 %v827
    %v849 = vpop.f32.mrf.mxu0
    %v850 = vadd.f32 %v821, %v849
    %851 = vdwg.mxu0
    %v852 = vadd.f32 %v453, %v847
    %v853 = vadd.f32 %v454, %v850
    %v854 = vsel %vm53, %v852, 0.0
    %855 = vadd.xlane.f32.xlu0 %v854
    %v856 = vpop.xlane.xlu0 %855
    %v857 = vsel %vm53, %v853, 0.0
    %858 = vadd.xlane.f32.xlu0 %v857
    %v859 = vpop.xlane.xlu0 %858
    %v860 = vmul.f32 %v856, %v66
    %v861 = vmul.f32 %v859, %v66
    %v862 = vsub.f32 %v852, %v860
    %v863 = vsub.f32 %v853, %v861
    %v864 = vmul.f32 %v862, %v862
    %v865 = vmul.f32 %v863, %v863
    %v866 = vsel %vm53, %v864, 0.0
    %867 = vadd.xlane.f32.xlu0 %v866
    %v868 = vpop.xlane.xlu0 %867
    %v869 = vsel %vm53, %v865, 0.0
    %870 = vadd.xlane.f32.xlu0 %v869
    %v871 = vpop.xlane.xlu0 %870
    %v872 = vmul.f32 %v868, 0.032258064
    %v873 = vmul.f32 %v871, 0.032258064
    %v874 = vrsqrt.pop %v872
    %v875 = vmul.f32 %v874, %v872
    %v876 = vmul.f32 %v875, %v874
    %v877 = vmul.f32 0.5, %v876
    %v878 = vsub.f32 1.5, %v877
    %v879 = vmul.f32 %v874, %v878
    %v880 = vmul.f32 %v872, %v879
    %vm881 = vcmp.eq.f32.partialorder %v872, inf
    %v882 = vsel %vm881, %v872, %v880
    %vm883 = vcmp.eq.f32.partialorder %v872, 0.0
    %v884 = vand.u32 %v872, 2147483648
    %v885 = vsel %vm883, %v884, %v882
    %v886 = vrsqrt.pop %v873
    %v887 = vmul.f32 %v886, %v873
    %v888 = vmul.f32 %v887, %v886
    %v889 = vmul.f32 0.5, %v888
    %v890 = vsub.f32 1.5, %v889
    %v891 = vmul.f32 %v886, %v890
    %v892 = vmul.f32 %v873, %v891
    %vm893 = vcmp.eq.f32.partialorder %v873, inf
    %v894 = vsel %vm893, %v873, %v892
    %vm895 = vcmp.eq.f32.partialorder %v873, 0.0
    %v896 = vand.u32 %v873, 2147483648
    %v897 = vsel %vm895, %v896, %v894
    %v898 = vadd.f32 %v885, 1e-06
    %v899 = vadd.f32 %v897, 1e-06
    %v900 = vrcp.pop %v898
    %v901 = vmul.f32 %v898, %v900
    %v902 = vsub.f32 1.0, %v901
    %v903 = vmul.f32 %v900, %v902
    %v904 = vadd.f32 %v900, %v903
    %vm905 = vweird.f32 %v898
    %vm906 = vweird.f32 %v900
    %vm907 = vmor %vm905, %vm906
    %v908 = vsel %vm907, %v900, %v904
    %v909 = vand.u32 2147483647, %v898
    %vm910 = vcmp.eq.f32.partialorder %v909, 8.507059e+37
    %v911 = vand.u32 %v898, 2147483648
    %v912 = vor.u32 1.1754944e-38, %v911
    %v913 = vsel %vm910, %v912, %v908
    %v914 = vrcp.pop %v899
    %v915 = vmul.f32 %v899, %v914
    %v916 = vsub.f32 1.0, %v915
    %v917 = vmul.f32 %v914, %v916
    %v918 = vadd.f32 %v914, %v917
    %vm919 = vweird.f32 %v899
    %vm920 = vweird.f32 %v914
    %vm921 = vmor %vm919, %vm920
    %v922 = vsel %vm921, %v914, %v918
    %v923 = vand.u32 2147483647, %v899
    %vm924 = vcmp.eq.f32.partialorder %v923, 8.507059e+37
    %v925 = vand.u32 %v899, 2147483648
    %v926 = vor.u32 1.1754944e-38, %v925
    %v927 = vsel %vm924, %v926, %v922
    %v928 = vmul.f32 %v862, %v913
    %v929 = vmul.f32 %v863, %v927
    %v930 = vadd.f32 %v928, 0.0
    %v931 = vadd.f32 %v929, 0.0
    %v932 = vld [vmem:[#allocation2 + $0x40] sm:$0xff]
    %v933 = vld [vmem:[#allocation2 + $0x88] sm:$0xff]
    %v934 = vld [vmem:[#allocation2 + $0xd0] sm:$0xff]
    %v935 = vld [vmem:[#allocation2 + $0x118] sm:$0xff]
    %v936 = vld [vmem:[%s8 + $0x8] sm:$0x1]
    %v938 = vperm.slane %v936, 0
    %v941 = vsel %vm53, %v930, 0
    %v944 = vsel %vm53, %v931, 0
    %946 = vmatpush.msra.mxu0 0.0
    %947 = vmatpush.msra.mxu0 0.0
    %948 = vmatpush.msra.mxu0 0.0
    %949 = vmatpush.msra.mxu0 0.0
    %950 = vmatpush.msra.mxu0 0.0
    %951 = vmatpush.msra.mxu0 0.0
    %952 = vmatpush.msra.mxu0 0.0
    %953 = vmatpush.msra.mxu0 0.0
    %954 = vmatpush.msra.mxu0 0.0
    %955 = vmatpush.msra.mxu0 0.0
    %956 = vmatpush.msra.mxu0 0.0
    %957 = vmatpush.msra.mxu0 0.0
    %958 = vmatpush.msra.mxu0 %v935
    %959 = vmatpush.msra.mxu0 %v934
    %960 = vmatpush.msra.mxu0 %v933
    %961 = vmatpush.msra.mxu0 %v932
    %962 = vmatmul.f32.gmra.mxu0 %v941
    %v963 = vpop.f32.mrf.mxu0
    %v964 = vadd.f32 %v938, %v963
    %965 = vmatmul.f32.gmra.mxu0 %v944
    %v966 = vpop.f32.mrf.mxu0
    %v967 = vadd.f32 %v938, %v966
    %968 = vdwg.mxu0
    %v969 = vmax.f32 %v964, 0.0
    %v970 = vmax.f32 %v967, 0.0
    %v971 = vld [vmem:[%s7] sm:$0xff]
    %v972 = vld [vmem:[%s7 + $0x8] sm:$0xff]
    %v973 = vld [vmem:[%s7 + $0x10] sm:$0xff]
    %v974 = vld [vmem:[%s7 + $0x18] sm:$0xff]
    %v975 = vld [vmem:[%s7 + $0x20] sm:$0xff]
    %v976 = vld [vmem:[%s7 + $0x28] sm:$0xff]
    %v977 = vld [vmem:[%s7 + $0x30] sm:$0xff]
    %v978 = vld [vmem:[%s7 + $0x38] sm:$0xff]
    %v980 = vsel %vm326, %v969, 0
    %v983 = vsel %vm326, %v970, 0
    %985 = vmatpush.msra.mxu0 0.0
    %986 = vmatpush.msra.mxu0 0.0
    %987 = vmatpush.msra.mxu0 0.0
    %988 = vmatpush.msra.mxu0 0.0
    %989 = vmatpush.msra.mxu0 0.0
    %990 = vmatpush.msra.mxu0 0.0
    %991 = vmatpush.msra.mxu0 0.0
    %992 = vmatpush.msra.mxu0 0.0
    %993 = vmatpush.msra.mxu0 %v978
    %994 = vmatpush.msra.mxu0 %v977
    %995 = vmatpush.msra.mxu0 %v976
    %996 = vmatpush.msra.mxu0 %v975
    %997 = vmatpush.msra.mxu0 %v974
    %998 = vmatpush.msra.mxu0 %v973
    %999 = vmatpush.msra.mxu0 %v972
    %1000 = vmatpush.msra.mxu0 %v971
    %1001 = vmatmul.f32.gmra.mxu0 %v980
    %v1002 = vpop.f32.mrf.mxu0
    %v1003 = vadd.f32 0.0, %v1002
    %1004 = vmatmul.f32.gmra.mxu0 %v983
    %v1005 = vpop.f32.mrf.mxu0
    %v1006 = vadd.f32 0.0, %v1005
    %1007 = vdwg.mxu0
    %v1008 = vadd.f32 %v852, %v1003
    %v1009 = vadd.f32 %v853, %v1006
    %v1010 = vld [vmem:[%s8 + $0x9] sm:$0x1]
    %v1012 = vperm.slane %v1010, 0
    %v1014 = vadd.f32 %v1008, %v1012
    %v1015 = vadd.f32 %v1009, %v1012
    %1016 = vst.msk [vmem:[#allocation5] sm:$0xff] %vm53, %v1014
    %1017 = vst.msk [vmem:[#allocation5 + $0x8] sm:$0xff] %vm53, %v1015
    // Predicated region
    $region42: #{decoder_layer.1} parent=1 // pred_check
      _
    $region43: #{decoder_layer.1} parent=1 // pred_check_branch
      %1019 = sbr.rel (0) target = $region45
    $region44: #{decoder_layer.1} parent=1 // pred_region
      %1021 = vsyncadd [#allocation4], 0
      %s1022 = sshll.u32 [#allocation5], 4
      %s1023 = int_to_ptr.vmem [resolvable:$true] %s1022
      %s1024 = sshll.u32 %s9, 4
      %s1025 = int_to_ptr.hbm [resolvable:$true] %s1024
      %1030 = dma.vmem_to_hbm [thread:$0]  %s1023, 256, %s1025, [#allocation4], 128, 128, 8
    $region45: #{decoder_layer.1} parent=1 // pred_fallthru
      _
    // Predicated region
    $region46: #{decoder_layer.1} parent=1 // pred_check
      _
    $region47: #{decoder_layer.1} parent=1 // pred_check_branch
      %1032 = sbr.rel (0) target = $region49
    $region48: #{decoder_layer.1} parent=1 // pred_region
      %1034 = dma.done [#allocation4], 256
    $region49: #{decoder_layer.1} parent=1 // pred_fallthru
      _
    %1035 = vsyncpa [#allocation3], 1
    %1036 = vsyncpa [#allocation4], 1

</llo_original>
